<compile_context>
chip_gen: v7x
topology: tpu7x:2x2x1
jax: 0.10.0
libtpu: 0.0.40
codegen_flags: <defaults>
</compile_context>

<pallas_src>
import functools

import jax
import jax.numpy as jnp
from jax.experimental import pallas as pl
from jax.experimental.pallas import tpu as pltpu


def _round_up(n, m):
    return ((n + m - 1) // m) * m


def _pick_batch_tile(batch, block_b):
    """Rows per grid step.

    - tiny batches (<= 8 rows): a single block equal to the full batch.
    - otherwise: ~block_b-row tiles, but never fewer than 2 grid steps so the
      "parallel" batch axis can be sharded across both v7x TensorCores, and
      sized as round_up(cdiv(B, steps), 8) so padded/ragged rows are minimal.
    """
    if batch <= 8:
        return batch
    num_steps = max(2, -(-batch // block_b))
    tb = _round_up(-(-batch // num_steps), 8)
    return min(tb, _round_up(batch, 8))


def _actor_kernel(x_ref, w1_ref, b1_ref, w2_ref, b2_ref, w3_ref, b3_ref,
                  out_ref, *, action_type):
    """One (TB, state) batch tile; weights/biases are full VMEM-resident."""
    x = x_ref[...]

    # fc1 + ReLU
    h1 = jnp.dot(x, w1_ref[...], preferred_element_type=jnp.float32)
    h1 = jnp.maximum(h1 + b1_ref[...], 0.0)

    # fc2 + ReLU
    h2 = jnp.dot(h1, w2_ref[...], preferred_element_type=jnp.float32)
    h2 = jnp.maximum(h2 + b2_ref[...], 0.0)

    # fc3
    logits = jnp.dot(h2, w3_ref[...], preferred_element_type=jnp.float32)
    logits = logits + b3_ref[...]

    if action_type == "continuous":
        out_ref[...] = jnp.tanh(logits)
    elif action_type == "discrete":
        # Exact softmax (no padded lanes to mask, exact divide).
        m = jnp.max(logits, axis=-1, keepdims=True)
        e = jnp.exp(logits - m)
        out_ref[...] = e / jnp.sum(e, axis=-1, keepdims=True)
    else:
        raise ValueError(f"unknown action_type: {action_type}")


def actor_forward(state, params, action_type, *, block_b=1024):
    """Fused Actor forward pass.

    state : (B, state_size) float32
    params: dict with w1 (S,Hi), b1 (1,Hi), w2 (Hi,Ho), b2 (1,Ho),
            w3 (Ho,A), b3 (1,A)  -- weights already transposed to (in, out).
    """
    state = state.astype(jnp.float32)
    B, S = state.shape
    Hi = params["w1"].shape[1]
    Ho = params["w2"].shape[1]
    A = params["w3"].shape[1]

    TB = _pick_batch_tile(B, block_b)
    grid = (pl.cdiv(B, TB),)

    w1 = params["w1"].astype(jnp.float32)
    b1 = params["b1"].astype(jnp.float32)
    w2 = params["w2"].astype(jnp.float32)
    b2 = params["b2"].astype(jnp.float32)
    w3 = params["w3"].astype(jnp.float32)
    b3 = params["b3"].astype(jnp.float32)

    kernel = functools.partial(_actor_kernel, action_type=action_type)

    nbytes = lambda a: int(a.size) * a.dtype.itemsize
    flops = 2 * B * (S * Hi + Hi * Ho + Ho * A)
    bytes_accessed = (nbytes(state) + nbytes(w1) + nbytes(b1) + nbytes(w2)
                      + nbytes(b2) + nbytes(w3) + nbytes(b3) + B * A * 4)

    return pl.pallas_call(
        kernel,
        out_shape=jax.ShapeDtypeStruct((B, A), jnp.float32),
        grid=grid,
        in_specs=[
            # state: tiled along batch, streamed/double-buffered.
            pl.BlockSpec((TB, S), lambda i: (i, 0)),
            # weights / biases: constant index maps -> VMEM-resident.
            pl.BlockSpec((S, Hi), lambda i: (0, 0)),
            pl.BlockSpec((1, Hi), lambda i: (0, 0)),
            pl.BlockSpec((Hi, Ho), lambda i: (0, 0)),
            pl.BlockSpec((1, Ho), lambda i: (0, 0)),
            pl.BlockSpec((Ho, A), lambda i: (0, 0)),
            pl.BlockSpec((1, A), lambda i: (0, 0)),
        ],
        out_specs=pl.BlockSpec((TB, A), lambda i: (i, 0)),
        compiler_params=pltpu.CompilerParams(
            dimension_semantics=("parallel",)),
        cost_estimate=pl.CostEstimate(
            flops=flops,
            transcendentals=B * A,
            bytes_accessed=bytes_accessed),
    )(state, w1, b1, w2, b2, w3, b3)


def init_actor_params(key, action_size, state_size, hidden_in_size,
                      hidden_out_size, low=-0.03, high=0.03):
    """Deterministic uniform(-0.03, 0.03) init, matching initialize_weights."""
    ks = jax.random.split(key, 6)
    u = lambda k, shape: jax.random.uniform(
        k, shape, dtype=jnp.float32, minval=low, maxval=high)
    return {
        "w1": u(ks[0], (state_size, hidden_in_size)),
        "b1": u(ks[1], (1, hidden_in_size)),
        "w2": u(ks[2], (hidden_in_size, hidden_out_size)),
        "b2": u(ks[3], (1, hidden_out_size)),
        "w3": u(ks[4], (hidden_out_size, action_size)),
        "b3": u(ks[5], (1, action_size)),
    }


def _reference_forward(state, params, action_type):
    h1 = jnp.maximum(state @ params["w1"] + params["b1"], 0.0)
    h2 = jnp.maximum(h1 @ params["w2"] + params["b2"], 0.0)
    logits = h2 @ params["w3"] + params["b3"]
    if action_type == "continuous":
        return jnp.tanh(logits)
    return jax.nn.softmax(logits, axis=-1)


if __name__ == "__main__":
    key = jax.random.PRNGKey(0)
    k_param, k_state_small, k_state_big = jax.random.split(key, 3)

    # Small shapes consistent with the module.
    state_size = 16
    hidden_in_size = 32
    hidden_out_size = 32
    action_size = 4

    params = init_actor_params(k_param, action_size, state_size,
                               hidden_in_size, hidden_out_size)

    fwd = jax.jit(actor_forward, static_argnames=("action_type", "block_b"))

    ok = True

    # 1) tiny batch (single grid step, B < 8-row-multiple path).
    state_small = jax.random.normal(k_state_small, (8, state_size),
                                    dtype=jnp.float32)
    for action_type in ("continuous", "discrete"):
        out = jax.block_until_ready(fwd(state_small, params, action_type))
        ref = _reference_forward(state_small, params, action_type)
        if out.shape != ref.shape or not jnp.allclose(out, ref,
                                                      atol=1e-5, rtol=1e-5):
            ok = False

    # 2) larger, non-tile-multiple batch: exercises the >=2-step parallel
    #    grid, the ragged last block and the VMEM-resident weights.
    state_big = jax.random.normal(k_state_big, (300, state_size),
                                  dtype=jnp.float32)
    for action_type in ("continuous", "discrete"):
        out = jax.block_until_ready(fwd(state_big, params, action_type))
        ref = _reference_forward(state_big, params, action_type)
        if out.shape != ref.shape or not jnp.allclose(out, ref,
                                                      atol=1e-5, rtol=1e-5):
            ok = False

    if ok:
        print("KERNEL_OK")
</pallas_src>

<mosaic_0001>
module attributes {stable_mosaic.version = 11 : i64} {
  func.func @_actor_kernel(%arg0: i32, %arg1: memref<8x16xf32, #tpu.memory_space<vmem>>, %arg2: memref<16x32xf32, #tpu.memory_space<vmem>>, %arg3: memref<1x32xf32, #tpu.memory_space<vmem>>, %arg4: memref<32x32xf32, #tpu.memory_space<vmem>>, %arg5: memref<1x32xf32, #tpu.memory_space<vmem>>, %arg6: memref<32x4xf32, #tpu.memory_space<vmem>>, %arg7: memref<1x4xf32, #tpu.memory_space<vmem>>, %arg8: memref<8x4xf32, #tpu.memory_space<vmem>>) attributes {dimension_semantics = [#tpu.dimension_semantics<parallel>], iteration_bounds = array<i64: 1>, scalar_prefetch = 0 : i64, scratch_operands = 0 : i64, tpu.core_type = #tpu.core_type<tc>, window_params = [{transform_indices = @transform_0, window_bounds = array<i64: 8, 16>}, {pipeline_mode = #tpu.pipeline_mode<synchronous>, transform_indices = @transform_1, window_bounds = array<i64: 16, 32>}, {pipeline_mode = #tpu.pipeline_mode<synchronous>, transform_indices = @transform_2, window_bounds = array<i64: 1, 32>}, {pipeline_mode = #tpu.pipeline_mode<synchronous>, transform_indices = @transform_3, window_bounds = array<i64: 32, 32>}, {pipeline_mode = #tpu.pipeline_mode<synchronous>, transform_indices = @transform_4, window_bounds = array<i64: 1, 32>}, {pipeline_mode = #tpu.pipeline_mode<synchronous>, transform_indices = @transform_5, window_bounds = array<i64: 32, 4>}, {pipeline_mode = #tpu.pipeline_mode<synchronous>, transform_indices = @transform_6, window_bounds = array<i64: 1, 4>}, {transform_indices = @transform_7, window_bounds = array<i64: 8, 4>}]} {
    %c0 = arith.constant 0 : index
    %c0_0 = arith.constant 0 : index
    %0 = vector.load %arg1[%c0, %c0_0] : memref<8x16xf32, #tpu.memory_space<vmem>>, vector<8x16xf32>
    %c0_1 = arith.constant 0 : index
    %c0_2 = arith.constant 0 : index
    %1 = vector.load %arg2[%c0_1, %c0_2] : memref<16x32xf32, #tpu.memory_space<vmem>>, vector<16x32xf32>
    %cst = arith.constant dense<0.000000e+00> : vector<8x32xf32>
    %2 = tpu.matmul %0, %1, %cst {dimension_numbers = #tpu.dot_dimension_numbers<[1], [0], [0], [1], [0, 0, 1, 1], [], []>} : vector<8x16xf32>, vector<16x32xf32>, vector<8x32xf32> -> vector<8x32xf32>
    %c0_3 = arith.constant 0 : index
    %c0_4 = arith.constant 0 : index
    %3 = vector.load %arg3[%c0_3, %c0_4] : memref<1x32xf32, #tpu.memory_space<vmem>>, vector<1x32xf32>
    %4 = vector.broadcast %3 : vector<1x32xf32> to vector<8x32xf32>
    %5 = arith.addf %2, %4 : vector<8x32xf32>
    %cst_5 = arith.constant 0.000000e+00 : f32
    %6 = vector.broadcast %cst_5 : f32 to vector<8x32xf32>
    %7 = arith.maximumf %5, %6 : vector<8x32xf32>
    %c0_6 = arith.constant 0 : index
    %c0_7 = arith.constant 0 : index
    %8 = vector.load %arg4[%c0_6, %c0_7] : memref<32x32xf32, #tpu.memory_space<vmem>>, vector<32x32xf32>
    %cst_8 = arith.constant dense<0.000000e+00> : vector<8x32xf32>
    %9 = tpu.matmul %7, %8, %cst_8 {dimension_numbers = #tpu.dot_dimension_numbers<[1], [0], [0], [1], [0, 0, 1, 1], [], []>} : vector<8x32xf32>, vector<32x32xf32>, vector<8x32xf32> -> vector<8x32xf32>
    %c0_9 = arith.constant 0 : index
    %c0_10 = arith.constant 0 : index
    %10 = vector.load %arg5[%c0_9, %c0_10] : memref<1x32xf32, #tpu.memory_space<vmem>>, vector<1x32xf32>
    %11 = vector.broadcast %10 : vector<1x32xf32> to vector<8x32xf32>
    %12 = arith.addf %9, %11 : vector<8x32xf32>
    %cst_11 = arith.constant 0.000000e+00 : f32
    %13 = vector.broadcast %cst_11 : f32 to vector<8x32xf32>
    %14 = arith.maximumf %12, %13 : vector<8x32xf32>
    %c0_12 = arith.constant 0 : index
    %c0_13 = arith.constant 0 : index
    %15 = vector.load %arg6[%c0_12, %c0_13] : memref<32x4xf32, #tpu.memory_space<vmem>>, vector<32x4xf32>
    %cst_14 = arith.constant dense<0.000000e+00> : vector<8x4xf32>
    %16 = tpu.matmul %14, %15, %cst_14 {dimension_numbers = #tpu.dot_dimension_numbers<[1], [0], [0], [1], [0, 0, 1, 1], [], []>} : vector<8x32xf32>, vector<32x4xf32>, vector<8x4xf32> -> vector<8x4xf32>
    %c0_15 = arith.constant 0 : index
    %c0_16 = arith.constant 0 : index
    %17 = vector.load %arg7[%c0_15, %c0_16] : memref<1x4xf32, #tpu.memory_space<vmem>>, vector<1x4xf32>
    %18 = vector.broadcast %17 : vector<1x4xf32> to vector<8x4xf32>
    %19 = arith.addf %16, %18 : vector<8x4xf32>
    %20 = math.tanh %19 : vector<8x4xf32>
    %c0_17 = arith.constant 0 : index
    %c0_18 = arith.constant 0 : index
    %21 = vector.load %arg8[%c0_17, %c0_18] : memref<8x4xf32, #tpu.memory_space<vmem>>, vector<8x4xf32>
    tpu.vector_store %arg8[%c0_17, %c0_18], %20 {strides = array<i32>} : memref<8x4xf32, #tpu.memory_space<vmem>>, vector<8x4xf32>,
    return
  }
  func.func @transform_0(%arg0: i32) -> (i32, i32) {
    %c0_i32 = arith.constant 0 : i32
    %c0_i32_0 = arith.constant 0 : i32
    return %arg0, %c0_i32 : i32, i32
  }
  func.func @transform_1(%arg0: i32) -> (i32, i32) {
    %c0_i32 = arith.constant 0 : i32
    %c0_i32_0 = arith.constant 0 : i32
    %c0_i32_1 = arith.constant 0 : i32
    return %c0_i32, %c0_i32_0 : i32, i32
  }
  func.func @transform_2(%arg0: i32) -> (i32, i32) {
    %c0_i32 = arith.constant 0 : i32
    %c0_i32_0 = arith.constant 0 : i32
    %c0_i32_1 = arith.constant 0 : i32
    return %c0_i32, %c0_i32_0 : i32, i32
  }
  func.func @transform_3(%arg0: i32) -> (i32, i32) {
    %c0_i32 = arith.constant 0 : i32
    %c0_i32_0 = arith.constant 0 : i32
    %c0_i32_1 = arith.constant 0 : i32
    return %c0_i32, %c0_i32_0 : i32, i32
  }
  func.func @transform_4(%arg0: i32) -> (i32, i32) {
    %c0_i32 = arith.constant 0 : i32
    %c0_i32_0 = arith.constant 0 : i32
    %c0_i32_1 = arith.constant 0 : i32
    return %c0_i32, %c0_i32_0 : i32, i32
  }
  func.func @transform_5(%arg0: i32) -> (i32, i32) {
    %c0_i32 = arith.constant 0 : i32
    %c0_i32_0 = arith.constant 0 : i32
    %c0_i32_1 = arith.constant 0 : i32
    return %c0_i32, %c0_i32_0 : i32, i32
  }
  func.func @transform_6(%arg0: i32) -> (i32, i32) {
    %c0_i32 = arith.constant 0 : i32
    %c0_i32_0 = arith.constant 0 : i32
    %c0_i32_1 = arith.constant 0 : i32
    return %c0_i32, %c0_i32_0 : i32, i32
  }
  func.func @transform_7(%arg0: i32) -> (i32, i32) {
    %c0_i32 = arith.constant 0 : i32
    %c0_i32_0 = arith.constant 0 : i32
    return %arg0, %c0_i32 : i32, i32
  }
}

</mosaic_0001>

<llo_original>
// kernel: actor_forward.1
$region0: #{actor_forward.1}
  #allocation0 [shape = 'u32[]', space=smem, size = 0x4, offset = 0x4, fixed_abs, tag = 'smem constant byte address 0x4 - core index']
  #allocation1 [shape = 'u32[144,128]{1,0:T(1,128)}', space=vmem, size = 0x12000, scoped, tag = 'internal scratch']
  %s0 = inlined_call_operand.hbm [shape: f32[8,16], index: 0, kind: input, shape index: {}]
  %s1 = inlined_call_operand.vmem [shape: f32[16,32], index: 1, kind: input, shape index: {}]
  %s2 = inlined_call_operand.vmem [shape: f32[1,32], index: 2, kind: input, shape index: {}]
  %s3 = inlined_call_operand.vmem [shape: f32[32,32], index: 3, kind: input, shape index: {}]
  %s4 = inlined_call_operand.vmem [shape: f32[1,32], index: 4, kind: input, shape index: {}]
  %s5 = inlined_call_operand.vmem [shape: f32[32,4], index: 5, kind: input, shape index: {}]
  %s6 = inlined_call_operand.vmem [shape: f32[1,4], index: 6, kind: input, shape index: {}]
  %s7 = inlined_call_operand.vmem [shape: f32[8,4], index: 7, kind: output, shape index: {}]
  %s8 = sld [smem:[#allocation0]]
  $region42: #{actor_forward.1} parent=0
    _
  %s10 = ssub.s32 1, %s8
  %s11 = scalar_select 0, %s10, %s8
  $region1: #{actor_forward.1} parent=0
    #allocation2 [shape = 'u8[4096]{0}', space=vmem, size = 0x1000, scoped, tag = 'input window, operand 0, single buffered']
    #allocation3 [shape = 's32[1]{0}', space=sflag, size = 0x4, scoped, tag = 'scoped memory for actor_forward.1']
    %12 = vsyncpa [#allocation3], 0
    // Predicated region
    $region2: #{actor_forward.1} parent=1 // pred_check
      _
    $region3: #{actor_forward.1} parent=1 // pred_check_branch
      %14 = sbr.rel (0) target = $region5
    $region4: #{actor_forward.1} parent=1 // pred_region
      %s16 = ssub.s32 128, 128
      %17 = vsyncadd [#allocation3], %s16
      %s19 = sshll.u32 [#allocation2], 4
      %s20 = int_to_ptr.vmem [resolvable:$true] %s19
      %22 = dma.hbm_to_vmem [thread:$0]  %s0, 128, %s20, [#allocation3]
    $region5: #{actor_forward.1} parent=1 // pred_fallthru
      _
    // Predicated region
    $region6: #{actor_forward.1} parent=1 // pred_check
      _
    $region7: #{actor_forward.1} parent=1 // pred_check_branch
      %24 = sbr.rel (0) target = $region9
    $region8: #{actor_forward.1} parent=1 // pred_region
      _
    $region9: #{actor_forward.1} parent=1 // pred_fallthru
      _
    // Predicated region
    $region10: #{actor_forward.1} parent=1 // pred_check
      _
    $region11: #{actor_forward.1} parent=1 // pred_check_branch
      %26 = sbr.rel (0) target = $region13
    $region12: #{actor_forward.1} parent=1 // pred_region
      _
    $region13: #{actor_forward.1} parent=1 // pred_fallthru
      _
    // Predicated region
    $region14: #{actor_forward.1} parent=1 // pred_check
      _
    $region15: #{actor_forward.1} parent=1 // pred_check_branch
      %28 = sbr.rel (0) target = $region17
    $region16: #{actor_forward.1} parent=1 // pred_region
      _
    $region17: #{actor_forward.1} parent=1 // pred_fallthru
      _
    // Predicated region
    $region18: #{actor_forward.1} parent=1 // pred_check
      _
    $region19: #{actor_forward.1} parent=1 // pred_check_branch
      %30 = sbr.rel (0) target = $region21
    $region20: #{actor_forward.1} parent=1 // pred_region
      _
    $region21: #{actor_forward.1} parent=1 // pred_fallthru
      _
    // Predicated region
    $region22: #{actor_forward.1} parent=1 // pred_check
      _
    $region23: #{actor_forward.1} parent=1 // pred_check_branch
      %32 = sbr.rel (0) target = $region25
    $region24: #{actor_forward.1} parent=1 // pred_region
      _
    $region25: #{actor_forward.1} parent=1 // pred_fallthru
      _
    // Predicated region
    $region26: #{actor_forward.1} parent=1 // pred_check
      _
    $region27: #{actor_forward.1} parent=1 // pred_check_branch
      %34 = sbr.rel (0) target = $region29
    $region28: #{actor_forward.1} parent=1 // pred_region
      _
    $region29: #{actor_forward.1} parent=1 // pred_fallthru
      _
    // Predicated region
    $region30: #{actor_forward.1} parent=1 // pred_check
      _
    $region31: #{actor_forward.1} parent=1 // pred_check_branch
      %36 = sbr.rel (0) target = $region33
    $region32: #{actor_forward.1} parent=1 // pred_region
      %37 = dma.done [#allocation3], 128
    $region33: #{actor_forward.1} parent=1 // pred_fallthru
      _
    %v38 = vld [vmem:[#allocation2] sm:$0xff]
    %v39 = vld [vmem:[%s1] sm:$0xff]
    %v40 = vld [vmem:[%s1 + $0x8] sm:$0xff]
    %v41 = vld [vmem:[%s2] sm:$0x1]
    %v43 = vlaneseq
    %v44 = vshrl.u32 %v43, 7
    %v45 = vsub.s32 0, %v44
    %v46 = vrot.slane %v41, %v45
    %vm48 = vcmask 130048
    %v50 = vsel %vm48, %v38, 0
    %52 = vmatprep.subr.mxu0 0.0
    %53 = vmatpush1.msra.mxu0 %v39
    %54 = vmatprep.subr.mxu0 0.0
    %55 = vmatpush1.msra.mxu0 %v40
    %56 = vmatprep.subr.mxu0 0.0
    %57 = vmatpush1.msra.mxu0 0.0
    %58 = vmatprep.subr.mxu0 0.0
    %59 = vmatpush1.msra.mxu0 0.0
    %60 = vmatprep.subr.mxu0 0.0
    %61 = vmatpush1.msra.mxu0 0.0
    %62 = vmatprep.subr.mxu0 0.0
    %63 = vmatpush1.msra.mxu0 0.0
    %64 = vmatprep.subr.mxu0 0.0
    %65 = vmatpush1.msra.mxu0 0.0
    %66 = vmatprep.subr.mxu0 0.0
    %67 = vmatpush1.msra.mxu0 0.0
    %68 = vmatprep.subr.mxu0 0.0
    %69 = vmatpush1.msra.mxu0 0.0
    %70 = vmatprep.subr.mxu0 0.0
    %71 = vmatpush1.msra.mxu0 0.0
    %72 = vmatprep.subr.mxu0 0.0
    %73 = vmatpush1.msra.mxu0 0.0
    %74 = vmatprep.subr.mxu0 0.0
    %75 = vmatpush1.msra.mxu0 0.0
    %76 = vmatprep.subr.mxu0 0.0
    %77 = vmatpush1.msra.mxu0 0.0
    %78 = vmatprep.subr.mxu0 0.0
    %79 = vmatpush1.msra.mxu0 0.0
    %80 = vmatprep.subr.mxu0 0.0
    %81 = vmatpush1.msra.mxu0 0.0
    %82 = vmatprep.subr.mxu0 0.0
    %83 = vmatpush1.msra.mxu0 0.0
    %84 = vmatprep.subr.mxu0 0.0
    %85 = vmatpush1.msra.mxu0 0.0
    %86 = vmatprep.subr.mxu0 0.0
    %87 = vmatpush1.msra.mxu0 0.0
    %88 = vmatprep.subr.mxu0 0.0
    %89 = vmatpush1.msra.mxu0 0.0
    %90 = vmatprep.subr.mxu0 0.0
    %91 = vmatpush1.msra.mxu0 0.0
    %92 = vmatprep.subr.mxu0 0.0
    %93 = vmatpush1.msra.mxu0 0.0
    %94 = vmatprep.subr.mxu0 0.0
    %95 = vmatpush1.msra.mxu0 0.0
    %96 = vmatprep.subr.mxu0 0.0
    %97 = vmatpush1.msra.mxu0 0.0
    %98 = vmatprep.subr.mxu0 0.0
    %99 = vmatpush1.msra.mxu0 0.0
    %100 = vmatprep.subr.mxu0 0.0
    %101 = vmatpush1.msra.mxu0 0.0
    %102 = vmatprep.subr.mxu0 0.0
    %103 = vmatpush1.msra.mxu0 0.0
    %104 = vmatprep.subr.mxu0 0.0
    %105 = vmatpush1.msra.mxu0 0.0
    %106 = vmatprep.subr.mxu0 0.0
    %107 = vmatpush1.msra.mxu0 0.0
    %108 = vmatprep.subr.mxu0 0.0
    %109 = vmatpush1.msra.mxu0 0.0
    %110 = vmatprep.subr.mxu0 0.0
    %111 = vmatpush1.msra.mxu0 0.0
    %112 = vmatprep.subr.mxu0 0.0
    %113 = vmatpush1.msra.mxu0 0.0
    %114 = vmatprep.subr.mxu0 0.0
    %115 = vmatpush1.msra.mxu0 0.0
    %116 = vmatprep.mubr.f32.mxu0 0.0
    %117 = vmatmul.mubr.f32.gmra.mrb[0].mxu0 %v50
    %v118 = vpop.f32.mrb[0].mxu0
    %v119 = vadd.f32 %v46, %v118
    %v120 = vpop.f32.mrb[0].mxu0
    %121 = vdwg.mxu0
    %v122 = vmax.f32 %v119, 0.0
    %v123 = vld [vmem:[%s3] sm:$0xff]
    %v124 = vld [vmem:[%s3 + $0x8] sm:$0xff]
    %v125 = vld [vmem:[%s3 + $0x10] sm:$0xff]
    %v126 = vld [vmem:[%s3 + $0x18] sm:$0xff]
    %v127 = vld [vmem:[%s4] sm:$0x1]
    %v129 = vlaneseq
    %v130 = vshrl.u32 %v129, 7
    %v131 = vsub.s32 0, %v130
    %v132 = vrot.slane %v127, %v131
    %vm134 = vcmask 261120
    %v136 = vsel %vm134, %v122, 0
    %138 = vmatprep.subr.mxu0 0.0
    %139 = vmatpush1.msra.mxu0 %v123
    %140 = vmatprep.subr.mxu0 0.0
    %141 = vmatpush1.msra.mxu0 %v124
    %142 = vmatprep.subr.mxu0 0.0
    %143 = vmatpush1.msra.mxu0 %v125
    %144 = vmatprep.subr.mxu0 0.0
    %145 = vmatpush1.msra.mxu0 %v126
    %146 = vmatprep.subr.mxu0 0.0
    %147 = vmatpush1.msra.mxu0 0.0
    %148 = vmatprep.subr.mxu0 0.0
    %149 = vmatpush1.msra.mxu0 0.0
    %150 = vmatprep.subr.mxu0 0.0
    %151 = vmatpush1.msra.mxu0 0.0
    %152 = vmatprep.subr.mxu0 0.0
    %153 = vmatpush1.msra.mxu0 0.0
    %154 = vmatprep.subr.mxu0 0.0
    %155 = vmatpush1.msra.mxu0 0.0
    %156 = vmatprep.subr.mxu0 0.0
    %157 = vmatpush1.msra.mxu0 0.0
    %158 = vmatprep.subr.mxu0 0.0
    %159 = vmatpush1.msra.mxu0 0.0
    %160 = vmatprep.subr.mxu0 0.0
    %161 = vmatpush1.msra.mxu0 0.0
    %162 = vmatprep.subr.mxu0 0.0
    %163 = vmatpush1.msra.mxu0 0.0
    %164 = vmatprep.subr.mxu0 0.0
    %165 = vmatpush1.msra.mxu0 0.0
    %166 = vmatprep.subr.mxu0 0.0
    %167 = vmatpush1.msra.mxu0 0.0
    %168 = vmatprep.subr.mxu0 0.0
    %169 = vmatpush1.msra.mxu0 0.0
    %170 = vmatprep.subr.mxu0 0.0
    %171 = vmatpush1.msra.mxu0 0.0
    %172 = vmatprep.subr.mxu0 0.0
    %173 = vmatpush1.msra.mxu0 0.0
    %174 = vmatprep.subr.mxu0 0.0
    %175 = vmatpush1.msra.mxu0 0.0
    %176 = vmatprep.subr.mxu0 0.0
    %177 = vmatpush1.msra.mxu0 0.0
    %178 = vmatprep.subr.mxu0 0.0
    %179 = vmatpush1.msra.mxu0 0.0
    %180 = vmatprep.subr.mxu0 0.0
    %181 = vmatpush1.msra.mxu0 0.0
    %182 = vmatprep.subr.mxu0 0.0
    %183 = vmatpush1.msra.mxu0 0.0
    %184 = vmatprep.subr.mxu0 0.0
    %185 = vmatpush1.msra.mxu0 0.0
    %186 = vmatprep.subr.mxu0 0.0
    %187 = vmatpush1.msra.mxu0 0.0
    %188 = vmatprep.subr.mxu0 0.0
    %189 = vmatpush1.msra.mxu0 0.0
    %190 = vmatprep.subr.mxu0 0.0
    %191 = vmatpush1.msra.mxu0 0.0
    %192 = vmatprep.subr.mxu0 0.0
    %193 = vmatpush1.msra.mxu0 0.0
    %194 = vmatprep.subr.mxu0 0.0
    %195 = vmatpush1.msra.mxu0 0.0
    %196 = vmatprep.subr.mxu0 0.0
    %197 = vmatpush1.msra.mxu0 0.0
    %198 = vmatprep.subr.mxu0 0.0
    %199 = vmatpush1.msra.mxu0 0.0
    %200 = vmatprep.subr.mxu0 0.0
    %201 = vmatpush1.msra.mxu0 0.0
    %202 = vmatprep.mubr.f32.mxu0 0.0
    %203 = vmatmul.mubr.f32.gmra.mrb[0].mxu0 %v136
    %v204 = vpop.f32.mrb[0].mxu0
    %v205 = vadd.f32 %v132, %v204
    %v206 = vpop.f32.mrb[0].mxu0
    %207 = vdwg.mxu0
    %v208 = vmax.f32 %v205, 0.0
    %v209 = vld [vmem:[%s5] sm:$0xff]
    %v210 = vld [vmem:[%s5 + $0x8] sm:$0xff]
    %v211 = vld [vmem:[%s5 + $0x10] sm:$0xff]
    %v212 = vld [vmem:[%s5 + $0x18] sm:$0xff]
    %v213 = vld [vmem:[%s6] sm:$0x1]
    %v215 = vlaneseq
    %v216 = vshrl.u32 %v215, 7
    %v217 = vsub.s32 0, %v216
    %v218 = vrot.slane %v213, %v217
    %v221 = vsel %vm134, %v208, 0
    %223 = vmatprep.subr.mxu0 0.0
    %224 = vmatpush1.msra.mxu0 %v209
    %225 = vmatprep.subr.mxu0 0.0
    %226 = vmatpush1.msra.mxu0 %v210
    %227 = vmatprep.subr.mxu0 0.0
    %228 = vmatpush1.msra.mxu0 %v211
    %229 = vmatprep.subr.mxu0 0.0
    %230 = vmatpush1.msra.mxu0 %v212
    %231 = vmatprep.subr.mxu0 0.0
    %232 = vmatpush1.msra.mxu0 0.0
    %233 = vmatprep.subr.mxu0 0.0
    %234 = vmatpush1.msra.mxu0 0.0
    %235 = vmatprep.subr.mxu0 0.0
    %236 = vmatpush1.msra.mxu0 0.0
    %237 = vmatprep.subr.mxu0 0.0
    %238 = vmatpush1.msra.mxu0 0.0
    %239 = vmatprep.subr.mxu0 0.0
    %240 = vmatpush1.msra.mxu0 0.0
    %241 = vmatprep.subr.mxu0 0.0
    %242 = vmatpush1.msra.mxu0 0.0
    %243 = vmatprep.subr.mxu0 0.0
    %244 = vmatpush1.msra.mxu0 0.0
    %245 = vmatprep.subr.mxu0 0.0
    %246 = vmatpush1.msra.mxu0 0.0
    %247 = vmatprep.subr.mxu0 0.0
    %248 = vmatpush1.msra.mxu0 0.0
    %249 = vmatprep.subr.mxu0 0.0
    %250 = vmatpush1.msra.mxu0 0.0
    %251 = vmatprep.subr.mxu0 0.0
    %252 = vmatpush1.msra.mxu0 0.0
    %253 = vmatprep.subr.mxu0 0.0
    %254 = vmatpush1.msra.mxu0 0.0
    %255 = vmatprep.subr.mxu0 0.0
    %256 = vmatpush1.msra.mxu0 0.0
    %257 = vmatprep.subr.mxu0 0.0
    %258 = vmatpush1.msra.mxu0 0.0
    %259 = vmatprep.subr.mxu0 0.0
    %260 = vmatpush1.msra.mxu0 0.0
    %261 = vmatprep.subr.mxu0 0.0
    %262 = vmatpush1.msra.mxu0 0.0
    %263 = vmatprep.subr.mxu0 0.0
    %264 = vmatpush1.msra.mxu0 0.0
    %265 = vmatprep.subr.mxu0 0.0
    %266 = vmatpush1.msra.mxu0 0.0
    %267 = vmatprep.subr.mxu0 0.0
    %268 = vmatpush1.msra.mxu0 0.0
    %269 = vmatprep.subr.mxu0 0.0
    %270 = vmatpush1.msra.mxu0 0.0
    %271 = vmatprep.subr.mxu0 0.0
    %272 = vmatpush1.msra.mxu0 0.0
    %273 = vmatprep.subr.mxu0 0.0
    %274 = vmatpush1.msra.mxu0 0.0
    %275 = vmatprep.subr.mxu0 0.0
    %276 = vmatpush1.msra.mxu0 0.0
    %277 = vmatprep.subr.mxu0 0.0
    %278 = vmatpush1.msra.mxu0 0.0
    %279 = vmatprep.subr.mxu0 0.0
    %280 = vmatpush1.msra.mxu0 0.0
    %281 = vmatprep.subr.mxu0 0.0
    %282 = vmatpush1.msra.mxu0 0.0
    %283 = vmatprep.subr.mxu0 0.0
    %284 = vmatpush1.msra.mxu0 0.0
    %285 = vmatprep.subr.mxu0 0.0
    %286 = vmatpush1.msra.mxu0 0.0
    %287 = vmatprep.mubr.f32.mxu0 0.0
    %288 = vmatmul.mubr.f32.gmra.mrb[0].mxu0 %v221
    %v289 = vpop.f32.mrb[0].mxu0
    %v290 = vadd.f32 %v218, %v289
    %v291 = vpop.f32.mrb[0].mxu0
    %292 = vdwg.mxu0
    %v293 = vtanh.pop %v290
    %vm294 = vcmask 31744
    %295 = vst.msk [vmem:[%s7] sm:$0xff] %vm294, %v293
    // Predicated region
    $region34: #{actor_forward.1} parent=1 // pred_check
      _
    $region35: #{actor_forward.1} parent=1 // pred_check_branch
      %297 = sbr.rel (0) target = $region37
    $region36: #{actor_forward.1} parent=1 // pred_region
      _
    $region37: #{actor_forward.1} parent=1 // pred_fallthru
      _
    // Predicated region
    $region38: #{actor_forward.1} parent=1 // pred_check
      _
    $region39: #{actor_forward.1} parent=1 // pred_check_branch
      %299 = sbr.rel (0) target = $region41
    $region40: #{actor_forward.1} parent=1 // pred_region
      _
    $region41: #{actor_forward.1} parent=1 // pred_fallthru
      _
    %300 = vsyncpa [#allocation3], 1

</llo_original>
